<compile_context>
chip_gen: v6e
topology: v6e:2x2x1
jax: 0.10.0
libtpu: 0.0.40
codegen_flags: <defaults>
</compile_context>

<pallas_src>
import functools

import jax
import jax.numpy as jnp
from jax import lax
from jax.experimental import pallas as pl
from jax.experimental.pallas import tpu as pltpu


_MAX_TILE_ROWS = 4096            # big tiles amortize the ~0.35us per-step cost


def _round_up(x, m):
    return (x + m - 1) // m * m


def _vmem_budget():
    """Returns (scoped vmem limit, per-input-per-pipeline-buffer byte budget)."""
    try:
        phys = int(pltpu.get_tpu_info().vmem_capacity_bytes)
    except Exception:
        phys = 64 << 20          # conservative fallback (v7x per-core VMEM)
    limit = min(max(phys // 2, 16 << 20), 64 << 20)
    # 2 heatmap inputs x 2 pipeline buffers, ~1/3 headroom for weights/scratch.
    return limit, limit // 6


def _choose_tiling(bj, bytes_per_row, per_buf_bytes):
    """Pick (tile_rows, n_tiles, num_parts, tiles_per_part).

    tile_rows is sublane-aligned, sized against the VMEM budget, capped at
    ~half the rows so v7x's two TensorCores both stream data, and never
    exceeds the array's row count (so the heatmaps need no padding; the
    ragged tail of the last tile is masked inside the kernel).
    """
    if bj <= 8:
        return bj, 1, 1, 1                       # single full-array block
    align = 16 if bj >= 16 else 8                # 16 also covers bf16 packing
    cap = per_buf_bytes // max(1, bytes_per_row)
    cap = min(cap, _MAX_TILE_ROWS)
    cap = max(align, (cap // align) * align)
    half = max(align, _round_up(-(-bj // 2), align))
    tile_rows = min(cap, half, (bj // align) * align)
    n_tiles = -(-bj // tile_rows)
    num_parts = 2 if n_tiles >= 2 else 1
    tiles_per_part = -(-n_tiles // num_parts)
    return tile_rows, n_tiles, num_parts, tiles_per_part


def _joints_mse_kernel(pred_ref, gt_ref, w_ref, out_ref, num_acc, w_acc,
                       *, tile_rows, valid_rows):
    """Processes one (tile_rows, HW) row tile.

    grid = (num_parts, tiles_per_part).  Axis 0 ("parallel") splits the row
    range across TensorCores; axis 1 ("arbitrary") is the reduction over the
    row tiles owned by this part.  Per-row partial sums accumulate in
    vreg-shaped f32 scratch; the cross-sublane reduce and the lane-dense
    (8, 128) output write happen only on the part's last inner step.
    Tail rows (logical row >= valid_rows) are masked before accumulation so
    boundary-block garbage (possibly NaN/Inf) never reaches the accumulator.
    """
    c = pl.program_id(0)
    i = pl.program_id(1)

    @pl.when(i == 0)
    def _init():
        num_acc[...] = jnp.zeros_like(num_acc)
        w_acc[...] = jnp.zeros_like(w_acc)

    # Logical (unclamped) row offset of this tile in the full row range.
    tile_idx = c * pl.num_programs(1) + i
    row_off = pl.multiple_of(tile_idx * tile_rows, 8)

    # Resident weights: one slice of the already-in-VMEM vector, no per-step DMA.
    w = w_ref[pl.ds(row_off, tile_rows), :]                  # (tile_rows, 1) f32

    # f32 math regardless of input dtype (bf16 inputs are cast here, not in
    # the wrapper, so HBM traffic stays at native width).
    diff = pred_ref[...].astype(jnp.float32) - gt_ref[...].astype(jnp.float32)
    row_sq = jnp.sum(diff * diff, axis=-1, keepdims=True)    # (tile_rows, 1)

    # Mask rows past the true row count (boundary garbage and clamped tiles).
    row_ids = row_off + lax.broadcasted_iota(jnp.int32, (tile_rows, 1), 0)
    row_sq = jnp.where(row_ids < valid_rows, row_sq, 0.0)

    num_acc[...] += w * w * row_sq       # == per-row sum((w*diff)^2)
    w_acc[...] += w                      # padded / masked rows contribute 0

    @pl.when(i == pl.num_programs(1) - 1)
    def _finalize():
        num = jnp.sum(num_acc[...])
        wsum = jnp.sum(w_acc[...])
        col = lax.broadcasted_iota(jnp.int32, out_ref.shape, 1)
        out_ref[...] = jnp.where(col == 0, num, jnp.where(col == 1, wsum, 0.0))


def joints_mse_loss(output, target, target_weight, *, max_tile_bytes=None):
    """Pallas implementation of JointsMSELoss.forward.

    Args:
      output:        (B, J, H, W) predicted heatmaps (f32 or bf16).
      target:        (B, J, H, W) ground-truth heatmaps (same dtype).
      target_weight: (B, J, 1) per-joint visibility weights.
      max_tile_bytes: optional override of the per-buffer tile budget (tests).
    Returns:
      scalar f32 loss.
    """
    B, J, H, W = output.shape
    HW = H * W
    BJ = B * J

    pred = output.reshape(BJ, HW)          # free reshapes, native dtype
    gt = target.reshape(BJ, HW)
    w = target_weight.reshape(BJ, 1).astype(jnp.float32)

    vmem_limit, per_buf = _vmem_budget()
    if max_tile_bytes is not None:
        per_buf = int(max_tile_bytes)

    itemsize = jnp.dtype(pred.dtype).itemsize
    tile_rows, n_tiles, num_parts, tiles_per_part = _choose_tiling(
        BJ, HW * itemsize, per_buf)

    # Only the tiny weight vector is padded (zeros), so it covers the full
    # logical grid; the big heatmap slabs are never copied/padded in HBM.
    w_rows = num_parts * tiles_per_part * tile_rows
    if w_rows != BJ:
        w = jnp.pad(w, ((0, w_rows - BJ), (0, 0)))

    def hm_map(c, i):
        t = c * tiles_per_part + i
        # Clamp so no DMA ever starts fully out of bounds; clamped tiles are
        # logically masked to zero inside the kernel.
        return (jnp.minimum(t, n_tiles - 1), 0)

    kernel = functools.partial(_joints_mse_kernel,
                               tile_rows=tile_rows, valid_rows=BJ)

    out = pl.pallas_call(
        kernel,
        out_shape=jax.ShapeDtypeStruct((num_parts * 8, 128), jnp.float32),
        grid_spec=pltpu.PrefetchScalarGridSpec(
            num_scalar_prefetch=0,
            grid=(num_parts, tiles_per_part),
            in_specs=[
                pl.BlockSpec((tile_rows, HW), hm_map),             # pred tile
                pl.BlockSpec((tile_rows, HW), hm_map),             # gt tile
                pl.BlockSpec((w_rows, 1), lambda c, i: (0, 0)),    # resident w
            ],
            out_specs=pl.BlockSpec((8, 128), lambda c, i: (c, 0)),
            scratch_shapes=[
                pltpu.VMEM((tile_rows, 1), jnp.float32),   # per-row w^2 * sum(diff^2)
                pltpu.VMEM((tile_rows, 1), jnp.float32),   # per-row weight sums
            ],
        ),
        compiler_params=pltpu.CompilerParams(
            dimension_semantics=("parallel", "arbitrary"),
            vmem_limit_bytes=vmem_limit,
        ),
        cost_estimate=pl.CostEstimate(
            flops=3 * BJ * HW,
            transcendentals=0,
            bytes_accessed=2 * BJ * HW * itemsize + w_rows * 4
                           + num_parts * 8 * 128 * 4,
        ),
    )(pred, gt, w)

    parts = out.reshape(num_parts, 8, 128)
    num = jnp.sum(parts[:, 0, 0])
    wsum = jnp.sum(parts[:, 0, 1])
    # Same divide-by-zero behavior as the PyTorch module when sum(w) == 0.
    return num / (wsum * jnp.float32(HW))


def _reference_loss(output, target, target_weight):
    """Pure-JAX reference mirroring the PyTorch module exactly."""
    B, J, H, W = output.shape
    pred = output.reshape(B, J, -1).astype(jnp.float32)
    gt = target.reshape(B, J, -1).astype(jnp.float32)
    w = target_weight.reshape(B, J, 1).astype(jnp.float32)
    loss = jnp.sum((w * pred - w * gt) ** 2)
    num_pred = jnp.sum(target_weight) * H * W
    return loss / num_pred


if __name__ == "__main__":
    def run_case(key, B, J, H, W, max_tile_bytes=None):
        k1, k2, k3 = jax.random.split(key, 3)
        output = jax.random.normal(k1, (B, J, H, W), dtype=jnp.float32)
        target = jax.random.normal(k2, (B, J, H, W), dtype=jnp.float32)
        # visibility weights in {0, 1}, shape (B, J, 1) like the original repo
        target_weight = (
            jax.random.uniform(k3, (B, J, 1), dtype=jnp.float32) > 0.3
        ).astype(jnp.float32)
        target_weight = target_weight.at[0, 0, 0].set(1.0)   # avoid all-zero w
        loss = jax.block_until_ready(
            joints_mse_loss(output, target, target_weight,
                            max_tile_bytes=max_tile_bytes))
        ref = jax.block_until_ready(
            _reference_loss(output, target, target_weight))
        assert jnp.allclose(loss, ref, rtol=1e-4, atol=1e-5), (
            (B, J, H, W), loss, ref)

    root = jax.random.PRNGKey(0)
    keys = jax.random.split(root, 3)
    # 1) tiny case: single full-array tile, 1 part
    run_case(keys[0], 2, 4, 16, 16)
    # 2) ragged row count (21 rows): 2 parts, partial boundary tile + masking
    run_case(keys[1], 3, 7, 16, 16)
    # 3) forced small tiles (70 rows, 16-row tiles): odd tile count -> one
    #    clamped+masked extra tile on part 1, multi-step accumulation per part
    run_case(keys[2], 10, 7, 16, 16, max_tile_bytes=16 * 16 * 16 * 4)

    print("KERNEL_OK")
</pallas_src>

<mosaic_0001>
module attributes {stable_mosaic.version = 11 : i64} {
  func.func @_joints_mse_kernel(%arg0: i32, %arg1: i32, %arg2: memref<8x256xf32, #tpu.memory_space<vmem>>, %arg3: memref<8x256xf32, #tpu.memory_space<vmem>>, %arg4: memref<8x1xf32, #tpu.memory_space<vmem>>, %arg5: memref<8x128xf32, #tpu.memory_space<vmem>>, %arg6: memref<8x1xf32, #tpu.memory_space<vmem>>, %arg7: memref<8x1xf32, #tpu.memory_space<vmem>>) attributes {dimension_semantics = [#tpu.dimension_semantics<parallel>, #tpu.dimension_semantics<arbitrary>], iteration_bounds = array<i64: 1, 1>, scalar_prefetch = 0 : i64, scratch_operands = 2 : i64, tpu.core_type = #tpu.core_type<tc>, window_params = [{transform_indices = @transform_0, window_bounds = array<i64: 8, 256>}, {transform_indices = @transform_1, window_bounds = array<i64: 8, 256>}, {pipeline_mode = #tpu.pipeline_mode<synchronous>, transform_indices = @transform_2, window_bounds = array<i64: 8, 1>}, {transform_indices = @transform_3, window_bounds = array<i64: 8, 128>}]} {
    %c0_i32 = arith.constant 0 : i32
    %0 = arith.cmpi eq, %arg1, %c0_i32 : i32
    %1 = arith.extui %0 : i1 to i32
    %c0_i32_0 = arith.constant 0 : i32
    %2 = arith.cmpi ne, %1, %c0_i32_0 : i32
    scf.if %2 {
      %cst_17 = arith.constant 0.000000e+00 : f32
      %33 = vector.broadcast %cst_17 : f32 to vector<8x1xf32>
      %c0_18 = arith.constant 0 : index
      %c0_19 = arith.constant 0 : index
      %34 = vector.load %arg6[%c0_18, %c0_19] : memref<8x1xf32, #tpu.memory_space<vmem>>, vector<8x1xf32>
      tpu.vector_store %arg6[%c0_18, %c0_19], %33 {strides = array<i32>} : memref<8x1xf32, #tpu.memory_space<vmem>>, vector<8x1xf32>,
      %cst_20 = arith.constant 0.000000e+00 : f32
      %35 = vector.broadcast %cst_20 : f32 to vector<8x1xf32>
      %c0_21 = arith.constant 0 : index
      %c0_22 = arith.constant 0 : index
      %36 = vector.load %arg7[%c0_21, %c0_22] : memref<8x1xf32, #tpu.memory_space<vmem>>, vector<8x1xf32>
      tpu.vector_store %arg7[%c0_21, %c0_22], %35 {strides = array<i32>} : memref<8x1xf32, #tpu.memory_space<vmem>>, vector<8x1xf32>,
    } else {
    }
    %c1_i32 = arith.constant 1 : i32
    %3 = arith.muli %arg0, %c1_i32 : i32
    %4 = arith.addi %3, %arg1 : i32
    %c8_i32 = arith.constant 8 : i32
    %5 = arith.muli %4, %c8_i32 : i32
    %6 = tpu.assume_multiple %5, 8 : i32
    %7 = arith.index_cast %6 : i32 to index
    %c0 = arith.constant 0 : index
    %8 = vector.load %arg4[%7, %c0] : memref<8x1xf32, #tpu.memory_space<vmem>>, vector<8x1xf32>
    %c0_1 = arith.constant 0 : index
    %c0_2 = arith.constant 0 : index
    %9 = vector.load %arg2[%c0_1, %c0_2] : memref<8x256xf32, #tpu.memory_space<vmem>>, vector<8x256xf32>
    %c0_3 = arith.constant 0 : index
    %c0_4 = arith.constant 0 : index
    %10 = vector.load %arg3[%c0_3, %c0_4] : memref<8x256xf32, #tpu.memory_space<vmem>>, vector<8x256xf32>
    %11 = arith.subf %9, %10 : vector<8x256xf32>
    %12 = arith.mulf %11, %11 : vector<8x256xf32>
    %cst = arith.constant dense<0.000000e+00> : vector<8xf32>
    %13 = vector.multi_reduction <add>, %12, %cst [1] : vector<8x256xf32> to vector<8xf32>
    %14 = vector.shape_cast %13 : vector<8xf32> to vector<8x1xf32>
    %15 = tpu.iota {dimensions = array<i32: 0>} : vector<8x1xi32>
    %16 = vector.broadcast %6 : i32 to vector<8x1xi32>
    %17 = arith.addi %16, %15 : vector<8x1xi32>
    %c8_i32_5 = arith.constant 8 : i32
    %18 = vector.broadcast %c8_i32_5 : i32 to vector<8x1xi32>
    %19 = arith.cmpi slt, %17, %18 : vector<8x1xi32>
    %cst_6 = arith.constant 0.000000e+00 : f32
    %20 = vector.broadcast %cst_6 : f32 to vector<8x1xf32>
    %21 = arith.select %19, %14, %20 : vector<8x1xi1>, vector<8x1xf32>
    %c0_7 = arith.constant 0 : index
    %c0_8 = arith.constant 0 : index
    %22 = vector.load %arg6[%c0_7, %c0_8] : memref<8x1xf32, #tpu.memory_space<vmem>>, vector<8x1xf32>
    %23 = arith.mulf %8, %8 : vector<8x1xf32>
    %24 = arith.mulf %23, %21 : vector<8x1xf32>
    %25 = arith.addf %22, %24 : vector<8x1xf32>
    %c0_9 = arith.constant 0 : index
    %c0_10 = arith.constant 0 : index
    %26 = vector.load %arg6[%c0_9, %c0_10] : memref<8x1xf32, #tpu.memory_space<vmem>>, vector<8x1xf32>
    tpu.vector_store %arg6[%c0_9, %c0_10], %25 {strides = array<i32>} : memref<8x1xf32, #tpu.memory_space<vmem>>, vector<8x1xf32>,
    %c0_11 = arith.constant 0 : index
    %c0_12 = arith.constant 0 : index
    %27 = vector.load %arg7[%c0_11, %c0_12] : memref<8x1xf32, #tpu.memory_space<vmem>>, vector<8x1xf32>
    %28 = arith.addf %27, %8 : vector<8x1xf32>
    %c0_13 = arith.constant 0 : index
    %c0_14 = arith.constant 0 : index
    %29 = vector.load %arg7[%c0_13, %c0_14] : memref<8x1xf32, #tpu.memory_space<vmem>>, vector<8x1xf32>
    tpu.vector_store %arg7[%c0_13, %c0_14], %28 {strides = array<i32>} : memref<8x1xf32, #tpu.memory_space<vmem>>, vector<8x1xf32>,
    %c0_i32_15 = arith.constant 0 : i32
    %30 = arith.cmpi eq, %arg1, %c0_i32_15 : i32
    %31 = arith.extui %30 : i1 to i32
    %c0_i32_16 = arith.constant 0 : i32
    %32 = arith.cmpi ne, %31, %c0_i32_16 : i32
    scf.if %32 {
      %c0_17 = arith.constant 0 : index
      %c0_18 = arith.constant 0 : index
      %33 = vector.load %arg6[%c0_17, %c0_18] : memref<8x1xf32, #tpu.memory_space<vmem>>, vector<8x1xf32>
      %34 = vector.shape_cast %33 : vector<8x1xf32> to vector<1x8x1xf32>
      %cst_19 = arith.constant dense<0.000000e+00> : vector<1xf32>
      %35 = vector.multi_reduction <add>, %34, %cst_19 [1, 2] : vector<1x8x1xf32> to vector<1xf32>
      %36 = vector.shape_cast %35 : vector<1xf32> to vector<1x1x1xf32>
      %37 = vector.extract %36[0, 0, 0] : f32 from vector<1x1x1xf32>
      %c0_20 = arith.constant 0 : index
      %c0_21 = arith.constant 0 : index
      %38 = vector.load %arg7[%c0_20, %c0_21] : memref<8x1xf32, #tpu.memory_space<vmem>>, vector<8x1xf32>
      %39 = vector.shape_cast %38 : vector<8x1xf32> to vector<1x8x1xf32>
      %cst_22 = arith.constant dense<0.000000e+00> : vector<1xf32>
      %40 = vector.multi_reduction <add>, %39, %cst_22 [1, 2] : vector<1x8x1xf32> to vector<1xf32>
      %41 = vector.shape_cast %40 : vector<1xf32> to vector<1x1x1xf32>
      %42 = vector.extract %41[0, 0, 0] : f32 from vector<1x1x1xf32>
      %43 = tpu.iota {dimensions = array<i32: 1>} : vector<8x128xi32>
      %c0_i32_23 = arith.constant 0 : i32
      %44 = vector.broadcast %c0_i32_23 : i32 to vector<8x128xi32>
      %45 = arith.cmpi eq, %43, %44 : vector<8x128xi32>
      %c1_i32_24 = arith.constant 1 : i32
      %46 = vector.broadcast %c1_i32_24 : i32 to vector<8x128xi32>
      %47 = arith.cmpi eq, %43, %46 : vector<8x128xi32>
      %cst_25 = arith.constant 0.000000e+00 : f32
      %48 = vector.broadcast %42 : f32 to vector<8x128xf32>
      %49 = vector.broadcast %cst_25 : f32 to vector<8x128xf32>
      %50 = arith.select %47, %48, %49 : vector<8x128xi1>, vector<8x128xf32>
      %51 = vector.broadcast %37 : f32 to vector<8x128xf32>
      %52 = arith.select %45, %51, %50 : vector<8x128xi1>, vector<8x128xf32>
      %c0_26 = arith.constant 0 : index
      %c0_27 = arith.constant 0 : index
      %53 = vector.load %arg5[%c0_26, %c0_27] : memref<8x128xf32, #tpu.memory_space<vmem>>, vector<8x128xf32>
      tpu.vector_store %arg5[%c0_26, %c0_27], %52 {strides = array<i32>} : memref<8x128xf32, #tpu.memory_space<vmem>>, vector<8x128xf32>,
    } else {
    }
    return
  }
  func.func @transform_0(%arg0: i32, %arg1: i32) -> (i32, i32) {
    %c1_i32 = arith.constant 1 : i32
    %0 = arith.muli %arg0, %c1_i32 : i32
    %1 = arith.addi %0, %arg1 : i32
    %c0_i32 = arith.constant 0 : i32
    %2 = arith.minsi %1, %c0_i32 : i32
    %c0_i32_0 = arith.constant 0 : i32
    %c0_i32_1 = arith.constant 0 : i32
    return %2, %c0_i32_0 : i32, i32
  }
  func.func @transform_1(%arg0: i32, %arg1: i32) -> (i32, i32) {
    %c1_i32 = arith.constant 1 : i32
    %0 = arith.muli %arg0, %c1_i32 : i32
    %1 = arith.addi %0, %arg1 : i32
    %c0_i32 = arith.constant 0 : i32
    %2 = arith.minsi %1, %c0_i32 : i32
    %c0_i32_0 = arith.constant 0 : i32
    %c0_i32_1 = arith.constant 0 : i32
    return %2, %c0_i32_0 : i32, i32
  }
  func.func @transform_2(%arg0: i32, %arg1: i32) -> (i32, i32) {
    %c0_i32 = arith.constant 0 : i32
    %c0_i32_0 = arith.constant 0 : i32
    %c0_i32_1 = arith.constant 0 : i32
    return %c0_i32, %c0_i32_0 : i32, i32
  }
  func.func @transform_3(%arg0: i32, %arg1: i32) -> (i32, i32) {
    %c0_i32 = arith.constant 0 : i32
    %c0_i32_0 = arith.constant 0 : i32
    return %arg0, %c0_i32 : i32, i32
  }
}

</mosaic_0001>

<llo_original>
// kernel: tpu_custom_call.1
$region0: #{tpu_custom_call.1}
  #allocation0 [shape = 'u32[]', space=smem, size = 0x4, offset = 0x4, fixed_abs, tag = 'smem constant byte address 0x4 - core index']
  #allocation1 [shape = 'u32[144,128]{1,0:T(1,128)}', space=vmem, size = 0x12000, scoped, tag = 'internal scratch']
  #allocation2 [shape = 'f32[8,1]{1,0:T(8,128)}', space=vmem, size = 0x1000, scoped, tag = 'scratch operand']
  #allocation3 [shape = 'f32[8,1]{1,0:T(8,128)}', space=vmem, size = 0x1000, scoped, tag = 'scratch operand']
  %s0 = inlined_call_operand.hbm [shape: f32[8,256], index: 0, kind: input, shape index: {}]
  %s1 = inlined_call_operand.hbm [shape: f32[8,256], index: 1, kind: input, shape index: {}]
  %s2 = inlined_call_operand.vmem [shape: f32[8,1], index: 2, kind: input, shape index: {}]
  %s3 = inlined_call_operand.hbm [shape: f32[8,128], index: 3, kind: output, shape index: {}]
  %s4 = sld [smem:[#allocation0]]
  $region38: #{tpu_custom_call.1} parent=0
    _
  %s6 = ssub.s32 1, %s4
  %s7 = scalar_select 0, %s6, %s4
  $region1: #{tpu_custom_call.1} parent=0
    #allocation4 [shape = 'u8[8192]{0}', space=vmem, size = 0x2000, scoped, tag = 'input window, operand 0, single buffered']
    #allocation5 [shape = 's32[1]{0}', space=sflag, size = 0x4, scoped, tag = 'scoped memory for tpu_custom_call.1']
    #allocation6 [shape = 's32[1]{0}', space=sflag, size = 0x4, scoped, tag = 'scoped memory for tpu_custom_call.1']
    #allocation7 [shape = 'u8[8192]{0}', space=vmem, size = 0x2000, scoped, tag = 'input window, operand 1, single buffered']
    #allocation8 [shape = 's32[1]{0}', space=sflag, size = 0x4, scoped, tag = 'scoped memory for tpu_custom_call.1']
    #allocation9 [shape = 'u8[4096]{0}', space=vmem, size = 0x1000, scoped, tag = 'output window, operand 0, single buffered']
    %8 = vsyncpa [#allocation5], 0
    %9 = vsyncpa [#allocation8], 0
    %10 = vsyncpa [#allocation6], 0
    // Predicated region
    $region2: #{tpu_custom_call.1} parent=1 // pred_check
      _
    $region3: #{tpu_custom_call.1} parent=1 // pred_check_branch
      %12 = sbr.rel (0) target = $region5
    $region4: #{tpu_custom_call.1} parent=1 // pred_region
      %s13 = sadd.s32 0, 0
      %p14 = scmp.lt.s32.totalorder %s13, 0
      %s15 = scalar_select %p14, %s13, 0
      %s17 = ssub.s32 256, 256
      %18 = vsyncadd [#allocation5], %s17
      %s19 = smul.addr %s15, 2
      %s20 = smul.addr %s19, 128
      %s21 = scalar_lea.hbm %s0, %s20
      %s23 = sshll.u32 [#allocation4], 4
      %s24 = int_to_ptr.vmem [resolvable:$true] %s23
      %26 = dma.hbm_to_vmem [thread:$0]  %s21, 256, %s24, [#allocation5]
    $region5: #{tpu_custom_call.1} parent=1 // pred_fallthru
      _
    // Predicated region
    $region6: #{tpu_custom_call.1} parent=1 // pred_check
      _
    $region7: #{tpu_custom_call.1} parent=1 // pred_check_branch
      %28 = sbr.rel (0) target = $region9
    $region8: #{tpu_custom_call.1} parent=1 // pred_region
      %s29 = sadd.s32 0, 0
      %p30 = scmp.lt.s32.totalorder %s29, 0
      %s31 = scalar_select %p30, %s29, 0
      %s33 = ssub.s32 256, 256
      %34 = vsyncadd [#allocation8], %s33
      %s35 = smul.addr %s31, 2
      %s36 = smul.addr %s35, 128
      %s37 = scalar_lea.hbm %s1, %s36
      %s39 = sshll.u32 [#allocation7], 4
      %s40 = int_to_ptr.vmem [resolvable:$true] %s39
      %42 = dma.hbm_to_vmem [thread:$0]  %s37, 256, %s40, [#allocation8]
    $region9: #{tpu_custom_call.1} parent=1 // pred_fallthru
      _
    // Predicated region
    $region10: #{tpu_custom_call.1} parent=1 // pred_check
      _
    $region11: #{tpu_custom_call.1} parent=1 // pred_check_branch
      %44 = sbr.rel (0) target = $region13
    $region12: #{tpu_custom_call.1} parent=1 // pred_region
      _
    $region13: #{tpu_custom_call.1} parent=1 // pred_fallthru
      _
    // Predicated region
    $region14: #{tpu_custom_call.1} parent=1 // pred_check
      _
    $region15: #{tpu_custom_call.1} parent=1 // pred_check_branch
      %46 = sbr.rel (0) target = $region17
    $region16: #{tpu_custom_call.1} parent=1 // pred_region
      %47 = dma.done [#allocation5], 256
    $region17: #{tpu_custom_call.1} parent=1 // pred_fallthru
      _
    // Predicated region
    $region18: #{tpu_custom_call.1} parent=1 // pred_check
      _
    $region19: #{tpu_custom_call.1} parent=1 // pred_check_branch
      %49 = sbr.rel (0) target = $region21
    $region20: #{tpu_custom_call.1} parent=1 // pred_region
      %50 = dma.done [#allocation8], 256
    $region21: #{tpu_custom_call.1} parent=1 // pred_fallthru
      _
    %s51 = sadd.s32 0, 0
    %p52 = scmp.lt.s32.totalorder %s51, 0
    %s53 = scalar_select %p52, %s51, 0
    %s54 = sadd.s32 0, 0
    %p55 = scmp.lt.s32.totalorder %s54, 0
    %s56 = scalar_select %p55, %s54, 0
    %p57 = scmp.eq.s32.totalorder 0, 0
    // Predicated region
    $region22: #{tpu_custom_call.1} parent=1 // pred_check
      %p58 = pneg %p57
    $region23: #{tpu_custom_call.1} parent=1 // pred_check_branch
      %60 = sbr.rel (%p58) target = $region25
    $region24: #{tpu_custom_call.1} parent=1 // pred_region
      %vm61 = vcmask 7168
      %62 = vst.msk [vmem:[#allocation2] sm:$0xff] %vm61, 0.0
      %63 = vst.msk [vmem:[#allocation3] sm:$0xff] %vm61, 0.0
    $region25: #{tpu_custom_call.1} parent=1 // pred_fallthru
      _
    %s64 = sadd.s32 0, 0
    %s65 = smul.u32 %s64, 8
    %s66 = scalar_lea.vmem %s2, %s65
    %v67 = vld [vmem:[%s66] sm:$0xff]
    %v68 = vld [vmem:[#allocation4] sm:$0xff]
    %v69 = vld [vmem:[#allocation4 + $0x8] sm:$0xff]
    %v70 = vld [vmem:[#allocation7] sm:$0xff]
    %v71 = vld [vmem:[#allocation7 + $0x8] sm:$0xff]
    %v72 = vsub.f32 %v68, %v70
    %v73 = vsub.f32 %v69, %v71
    %v74 = vmul.f32 %v72, %v72
    %v75 = vmul.f32 %v73, %v73
    %v76 = vadd.f32 %v74, %v75
    %77 = vadd.xlane.f32.xlu0 %v76
    %v78 = vpop.xlane.xlu0 %77
    %v79 = vlaneseq
    %v80 = vshrl.u32 %v79, 7
    %v81 = vstv %s65
    %v82 = vadd.s32 %v81, %v80
    %vm83 = vcmp.lt.s32.totalorder %v82, 8
    %v84 = vsel %vm83, %v78, 0.0
    %v85 = vld [vmem:[#allocation2] sm:$0xff]
    %v86 = vmul.f32 %v67, %v67
    %v87 = vmul.f32 %v86, %v84
    %v88 = vadd.f32 %v85, %v87
    %vm89 = vcmask 7168
    %90 = vst.msk [vmem:[#allocation2] sm:$0xff] %vm89, %v88
    %v91 = vld [vmem:[#allocation3] sm:$0xff]
    %v92 = vadd.f32 %v91, %v67
    %93 = vst.msk [vmem:[#allocation3] sm:$0xff] %vm89, %v92
    // Predicated region
    $region26: #{tpu_custom_call.1} parent=1 // pred_check
      %p94 = pneg %p57
    $region27: #{tpu_custom_call.1} parent=1 // pred_check_branch
      %96 = sbr.rel (%p94) target = $region29
    $region28: #{tpu_custom_call.1} parent=1 // pred_region
      %v97 = vld [vmem:[#allocation2] sm:$0xff]
      %v98 = vsel %vm89, %v97, 0.0
      %99 = vadd.xlane.f32.xlu0 %v98
      %v100 = vpop.xlane.xlu0 %99
      %v101 = vrot.slane %v100, 4
      %v102 = vadd.f32 %v100, %v101
      %v103 = vrot.slane %v102, 2
      %v104 = vadd.f32 %v102, %v103
      %v105 = vrot.slane %v104, 1
      %v106 = vadd.f32 %v104, %v105
      %s107 = vtos %v106
      %v108 = vld [vmem:[#allocation3] sm:$0xff]
      %v109 = vsel %vm89, %v108, 0.0
      %110 = vadd.xlane.f32.xlu0 %v109
      %v111 = vpop.xlane.xlu0 %110
      %v112 = vrot.slane %v111, 4
      %v113 = vadd.f32 %v111, %v112
      %v114 = vrot.slane %v113, 2
      %v115 = vadd.f32 %v113, %v114
      %v116 = vrot.slane %v115, 1
      %v117 = vadd.f32 %v115, %v116
      %s118 = vtos %v117
      %v119 = vlaneseq
      %v120 = vand.u32 %v119, 127
      %vm121 = vcmp.eq.s32.totalorder %v120, 0
      %vm122 = vcmp.eq.s32.totalorder %v120, 1
      %v123 = vstv %s118
      %v124 = vsel %vm122, %v123, 0.0
      %v125 = vstv %s107
      %v126 = vsel %vm121, %v125, %v124
      %127 = vst [vmem:[#allocation9] sm:$0xff] %v126
    $region29: #{tpu_custom_call.1} parent=1 // pred_fallthru
      _
    // Predicated region
    $region30: #{tpu_custom_call.1} parent=1 // pred_check
      _
    $region31: #{tpu_custom_call.1} parent=1 // pred_check_branch
      %129 = sbr.rel (0) target = $region33
    $region32: #{tpu_custom_call.1} parent=1 // pred_region
      %s131 = ssub.s32 128, 128
      %132 = vsyncadd [#allocation6], %s131
      %s134 = sshll.u32 [#allocation9], 4
      %s135 = int_to_ptr.vmem [resolvable:$true] %s134
      %137 = dma.vmem_to_hbm [thread:$0]  %s135, 128, %s3, [#allocation6]
    $region33: #{tpu_custom_call.1} parent=1 // pred_fallthru
      _
    // Predicated region
    $region34: #{tpu_custom_call.1} parent=1 // pred_check
      _
    $region35: #{tpu_custom_call.1} parent=1 // pred_check_branch
      %139 = sbr.rel (0) target = $region37
    $region36: #{tpu_custom_call.1} parent=1 // pred_region
      %140 = dma.done [#allocation6], 128
    $region37: #{tpu_custom_call.1} parent=1 // pred_fallthru
      _
    %141 = vsyncpa [#allocation5], 1
    %142 = vsyncpa [#allocation8], 1
    %143 = vsyncpa [#allocation6], 1

</llo_original>
